<compile_context>
chip_gen: v7x
topology: tpu7x:2x2x1
jax: 0.10.0
libtpu: 0.0.40
codegen_flags: <defaults>
</compile_context>

<pallas_src>
import jax
import jax.numpy as jnp
from jax.experimental import pallas as pl
from jax.experimental.pallas import tpu as pltpu

HIDDEN = 256


def actor_kernel(x_ref, w1_ref, b1_ref, w2_ref, b2_ref, o_ref):
    x = x_ref[...]          # f32 [TB, S]   (batch tile)
    w1 = w1_ref[...]        # bf16 [S, 256] (resident)
    b1 = b1_ref[...]        # f32 [1, 256]
    w2 = w2_ref[...]        # bf16 [256, A] (resident)
    b2 = b2_ref[...]        # f32 [1, A]

    # fc1 + ReLU: bf16 x bf16 MXU matmul with f32 accumulation; bias/ReLU in f32.
    h = jnp.dot(x.astype(jnp.bfloat16), w1,
                preferred_element_type=jnp.float32) + b1          # [TB, 256]
    h = jnp.maximum(h, 0.0)

    # fc2
    logits = jnp.dot(h.astype(jnp.bfloat16), w2,
                     preferred_element_type=jnp.float32) + b2     # [TB, A]

    # Numerically stable softmax over the action axis, all in f32 (v5e-safe).
    m = jnp.max(logits, axis=-1, keepdims=True)
    e = jnp.exp(logits - m)
    denom = jnp.sum(e, axis=-1, keepdims=True)
    o_ref[...] = (e * pl.reciprocal(denom, approx=True)).astype(o_ref.dtype)
    # TODO(synk): for very large B with tiny action_dim, present the output as a
    # lane-dense [B/16, 16*A] slab to avoid masked vst on the 8-wide last dim.


def _round_up(n, m):
    return (n + m - 1) // m * m


def actor_forward(x, w1, b1, w2, b2, *, max_tile_b=256):
    """x: [B, state_dim]; w1: [state_dim, 256]; b1: [256];
    w2: [256, action_dim]; b2: [action_dim] -> softmax probs [B, action_dim]."""
    B, S = x.shape
    H, A = w2.shape

    # Batch tile: sublane-aligned (multiple of 8), capped at max_tile_b (MXU-friendly).
    TB = min(max_tile_b, _round_up(B, 8))
    B_pad = _round_up(B, TB)
    if B_pad != B:
        x = jnp.pad(x, ((0, B_pad - B), (0, 0)))

    # Weights in bf16 (halve HBM traffic); biases 2D f32 for clean VMEM tiles.
    w1_bf = w1.astype(jnp.bfloat16)
    w2_bf = w2.astype(jnp.bfloat16)
    b1_2d = b1.reshape(1, H).astype(jnp.float32)
    b2_2d = b2.reshape(1, A).astype(jnp.float32)

    grid = (B_pad // TB,)
    flops = 2 * B_pad * (S * H + H * A)
    bytes_accessed = (x.size * 4 + w1_bf.size * 2 + w2_bf.size * 2
                      + b1_2d.size * 4 + b2_2d.size * 4 + B_pad * A * 4)

    out = pl.pallas_call(
        actor_kernel,
        out_shape=jax.ShapeDtypeStruct((B_pad, A), jnp.float32),
        grid=grid,
        in_specs=[
            pl.BlockSpec((TB, S), lambda i: (i, 0)),   # x: tiled over batch
            pl.BlockSpec((S, H), lambda i: (0, 0)),    # w1: resident across grid
            pl.BlockSpec((1, H), lambda i: (0, 0)),    # b1: resident
            pl.BlockSpec((H, A), lambda i: (0, 0)),    # w2: resident
            pl.BlockSpec((1, A), lambda i: (0, 0)),    # b2: resident
        ],
        out_specs=pl.BlockSpec((TB, A), lambda i: (i, 0)),
        compiler_params=pltpu.CompilerParams(
            dimension_semantics=("parallel",)),
        cost_estimate=pl.CostEstimate(
            flops=flops,
            transcendentals=B_pad * A,
            bytes_accessed=bytes_accessed),
    )(x, w1_bf, b1_2d, w2_bf, b2_2d)
    return out[:B]


def init_actor_params(key, state_dim, action_dim, hidden=HIDDEN):
    """Deterministic init mimicking nn.Linear's uniform(-1/sqrt(fan_in), +) init.
    Weights stored as [in_features, out_features] (transposed vs. PyTorch)."""
    k1, k2, k3, k4 = jax.random.split(key, 4)
    bound1 = 1.0 / jnp.sqrt(state_dim)
    bound2 = 1.0 / jnp.sqrt(hidden)
    w1 = jax.random.uniform(k1, (state_dim, hidden), jnp.float32, -bound1, bound1)
    b1 = jax.random.uniform(k2, (hidden,), jnp.float32, -bound1, bound1)
    w2 = jax.random.uniform(k3, (hidden, action_dim), jnp.float32, -bound2, bound2)
    b2 = jax.random.uniform(k4, (action_dim,), jnp.float32, -bound2, bound2)
    return w1, b1, w2, b2


if __name__ == "__main__":
    key = jax.random.PRNGKey(0)
    B, STATE_DIM, ACTION_DIM = 8, 16, 8

    kx, kp = jax.random.split(key)
    x = jax.random.normal(kx, (B, STATE_DIM), jnp.float32)
    w1, b1, w2, b2 = init_actor_params(kp, STATE_DIM, ACTION_DIM)

    out = actor_forward(x, w1, b1, w2, b2)
    out = jax.block_until_ready(out)

    # Reference (plain JAX, f32) using the same bf16-rounded weights the kernel sees.
    w1f = w1.astype(jnp.bfloat16).astype(jnp.float32)
    w2f = w2.astype(jnp.bfloat16).astype(jnp.float32)
    h_ref = jnp.maximum(x @ w1f + b1, 0.0)
    logits_ref = h_ref @ w2f + b2
    ref = jax.nn.softmax(logits_ref, axis=1)

    assert out.shape == (B, ACTION_DIM)
    # Tolerances loosened for bf16 matmul inputs and approx reciprocal.
    assert jnp.allclose(out, ref, atol=3e-2, rtol=0.0), \
        float(jnp.max(jnp.abs(out - ref)))
    assert jnp.allclose(jnp.sum(out, axis=1), 1.0, atol=5e-3)

    print("KERNEL_OK")
</pallas_src>

<mosaic_0001>
module attributes {stable_mosaic.version = 11 : i64} {
  func.func @actor_kernel(%arg0: i32, %arg1: memref<8x16xf32, #tpu.memory_space<vmem>>, %arg2: memref<16x256xbf16, #tpu.memory_space<vmem>>, %arg3: memref<1x256xf32, #tpu.memory_space<vmem>>, %arg4: memref<256x8xbf16, #tpu.memory_space<vmem>>, %arg5: memref<1x8xf32, #tpu.memory_space<vmem>>, %arg6: memref<8x8xf32, #tpu.memory_space<vmem>>) attributes {dimension_semantics = [#tpu.dimension_semantics<parallel>], iteration_bounds = array<i64: 1>, scalar_prefetch = 0 : i64, scratch_operands = 0 : i64, tpu.core_type = #tpu.core_type<tc>, window_params = [{transform_indices = @transform_0, window_bounds = array<i64: 8, 16>}, {pipeline_mode = #tpu.pipeline_mode<synchronous>, transform_indices = @transform_1, window_bounds = array<i64: 16, 256>}, {pipeline_mode = #tpu.pipeline_mode<synchronous>, transform_indices = @transform_2, window_bounds = array<i64: 1, 256>}, {pipeline_mode = #tpu.pipeline_mode<synchronous>, transform_indices = @transform_3, window_bounds = array<i64: 256, 8>}, {pipeline_mode = #tpu.pipeline_mode<synchronous>, transform_indices = @transform_4, window_bounds = array<i64: 1, 8>}, {transform_indices = @transform_5, window_bounds = array<i64: 8, 8>}]} {
    %c0 = arith.constant 0 : index
    %c0_0 = arith.constant 0 : index
    %0 = vector.load %arg1[%c0, %c0_0] : memref<8x16xf32, #tpu.memory_space<vmem>>, vector<8x16xf32>
    %c0_1 = arith.constant 0 : index
    %c0_2 = arith.constant 0 : index
    %1 = vector.load %arg2[%c0_1, %c0_2] : memref<16x256xbf16, #tpu.memory_space<vmem>>, vector<16x256xbf16>
    %c0_3 = arith.constant 0 : index
    %c0_4 = arith.constant 0 : index
    %2 = vector.load %arg3[%c0_3, %c0_4] : memref<1x256xf32, #tpu.memory_space<vmem>>, vector<1x256xf32>
    %c0_5 = arith.constant 0 : index
    %c0_6 = arith.constant 0 : index
    %3 = vector.load %arg4[%c0_5, %c0_6] : memref<256x8xbf16, #tpu.memory_space<vmem>>, vector<256x8xbf16>
    %c0_7 = arith.constant 0 : index
    %c0_8 = arith.constant 0 : index
    %4 = vector.load %arg5[%c0_7, %c0_8] : memref<1x8xf32, #tpu.memory_space<vmem>>, vector<1x8xf32>
    %5 = arith.truncf %0 : vector<8x16xf32> to vector<8x16xbf16>
    %cst = arith.constant dense<0.000000e+00> : vector<8x256xf32>
    %6 = tpu.matmul %5, %1, %cst {dimension_numbers = #tpu.dot_dimension_numbers<[1], [0], [0], [1], [0, 0, 1, 1], [], []>} : vector<8x16xbf16>, vector<16x256xbf16>, vector<8x256xf32> -> vector<8x256xf32>
    %7 = vector.broadcast %2 : vector<1x256xf32> to vector<8x256xf32>
    %8 = arith.addf %6, %7 : vector<8x256xf32>
    %cst_9 = arith.constant 0.000000e+00 : f32
    %9 = vector.broadcast %cst_9 : f32 to vector<8x256xf32>
    %10 = arith.maximumf %8, %9 : vector<8x256xf32>
    %11 = arith.truncf %10 : vector<8x256xf32> to vector<8x256xbf16>
    %cst_10 = arith.constant dense<0.000000e+00> : vector<8x8xf32>
    %12 = tpu.matmul %11, %3, %cst_10 {dimension_numbers = #tpu.dot_dimension_numbers<[1], [0], [0], [1], [0, 0, 1, 1], [], []>} : vector<8x256xbf16>, vector<256x8xbf16>, vector<8x8xf32> -> vector<8x8xf32>
    %13 = vector.broadcast %4 : vector<1x8xf32> to vector<8x8xf32>
    %14 = arith.addf %12, %13 : vector<8x8xf32>
    %cst_11 = arith.constant dense<0xFF800000> : vector<8xf32>
    %15 = vector.multi_reduction <maximumf>, %14, %cst_11 [1] : vector<8x8xf32> to vector<8xf32>
    %16 = vector.shape_cast %15 : vector<8xf32> to vector<8x1xf32>
    %17 = vector.broadcast %16 : vector<8x1xf32> to vector<8x8xf32>
    %18 = arith.subf %14, %17 : vector<8x8xf32>
    %19 = math.exp %18 : vector<8x8xf32>
    %cst_12 = arith.constant dense<0.000000e+00> : vector<8xf32>
    %20 = vector.multi_reduction <add>, %19, %cst_12 [1] : vector<8x8xf32> to vector<8xf32>
    %21 = vector.shape_cast %20 : vector<8xf32> to vector<8x1xf32>
    %22 = tpu.reciprocal %21 {approx = true} : vector<8x1xf32> -> vector<8x1xf32>
    %23 = vector.broadcast %22 : vector<8x1xf32> to vector<8x8xf32>
    %24 = arith.mulf %19, %23 : vector<8x8xf32>
    %c0_13 = arith.constant 0 : index
    %c0_14 = arith.constant 0 : index
    %25 = vector.load %arg6[%c0_13, %c0_14] : memref<8x8xf32, #tpu.memory_space<vmem>>, vector<8x8xf32>
    tpu.vector_store %arg6[%c0_13, %c0_14], %24 {strides = array<i32>} : memref<8x8xf32, #tpu.memory_space<vmem>>, vector<8x8xf32>,
    return
  }
  func.func @transform_0(%arg0: i32) -> (i32, i32) {
    %c0_i32 = arith.constant 0 : i32
    %c0_i32_0 = arith.constant 0 : i32
    return %arg0, %c0_i32 : i32, i32
  }
  func.func @transform_1(%arg0: i32) -> (i32, i32) {
    %c0_i32 = arith.constant 0 : i32
    %c0_i32_0 = arith.constant 0 : i32
    %c0_i32_1 = arith.constant 0 : i32
    return %c0_i32, %c0_i32_0 : i32, i32
  }
  func.func @transform_2(%arg0: i32) -> (i32, i32) {
    %c0_i32 = arith.constant 0 : i32
    %c0_i32_0 = arith.constant 0 : i32
    %c0_i32_1 = arith.constant 0 : i32
    return %c0_i32, %c0_i32_0 : i32, i32
  }
  func.func @transform_3(%arg0: i32) -> (i32, i32) {
    %c0_i32 = arith.constant 0 : i32
    %c0_i32_0 = arith.constant 0 : i32
    %c0_i32_1 = arith.constant 0 : i32
    return %c0_i32, %c0_i32_0 : i32, i32
  }
  func.func @transform_4(%arg0: i32) -> (i32, i32) {
    %c0_i32 = arith.constant 0 : i32
    %c0_i32_0 = arith.constant 0 : i32
    %c0_i32_1 = arith.constant 0 : i32
    return %c0_i32, %c0_i32_0 : i32, i32
  }
  func.func @transform_5(%arg0: i32) -> (i32, i32) {
    %c0_i32 = arith.constant 0 : i32
    %c0_i32_0 = arith.constant 0 : i32
    return %arg0, %c0_i32 : i32, i32
  }
}

</mosaic_0001>

<llo_original>
// kernel: tpu_custom_call.1
$region0: #{tpu_custom_call.1}
  #allocation0 [shape = 'u32[]', space=smem, size = 0x4, offset = 0x4, fixed_abs, tag = 'smem constant byte address 0x4 - core index']
  #allocation1 [shape = 'u32[144,128]{1,0:T(1,128)}', space=vmem, size = 0x12000, scoped, tag = 'internal scratch']
  %s0 = inlined_call_operand.vmem [shape: f32[8,16], index: 0, kind: input, shape index: {}]
  %s1 = inlined_call_operand.vmem [shape: bf16[16,256], index: 1, kind: input, shape index: {}]
  %s2 = inlined_call_operand.vmem [shape: f32[1,256], index: 2, kind: input, shape index: {}]
  %s3 = inlined_call_operand.vmem [shape: bf16[256,8], index: 3, kind: input, shape index: {}]
  %s4 = inlined_call_operand.vmem [shape: f32[1,8], index: 4, kind: input, shape index: {}]
  %s5 = inlined_call_operand.hbm [shape: f32[8,8], index: 5, kind: output, shape index: {}]
  %s6 = sld [smem:[#allocation0]]
  $region30: #{tpu_custom_call.1} parent=0
    _
  %s8 = ssub.s32 1, %s6
  %s9 = scalar_select 0, %s8, %s6
  $region1: #{tpu_custom_call.1} parent=0
    #allocation2 [shape = 'u8[4096]{0}', space=vmem, size = 0x1000, scoped, tag = 'output window, operand 0, single buffered']
    #allocation3 [shape = 's32[1]{0}', space=sflag, size = 0x4, scoped, tag = 'scoped memory for tpu_custom_call.1']
    %10 = vsyncpa [#allocation3], 0
    // Predicated region
    $region2: #{tpu_custom_call.1} parent=1 // pred_check
      _
    $region3: #{tpu_custom_call.1} parent=1 // pred_check_branch
      %12 = sbr.rel (0) target = $region5
    $region4: #{tpu_custom_call.1} parent=1 // pred_region
      _
    $region5: #{tpu_custom_call.1} parent=1 // pred_fallthru
      _
    // Predicated region
    $region6: #{tpu_custom_call.1} parent=1 // pred_check
      _
    $region7: #{tpu_custom_call.1} parent=1 // pred_check_branch
      %14 = sbr.rel (0) target = $region9
    $region8: #{tpu_custom_call.1} parent=1 // pred_region
      _
    $region9: #{tpu_custom_call.1} parent=1 // pred_fallthru
      _
    // Predicated region
    $region10: #{tpu_custom_call.1} parent=1 // pred_check
      _
    $region11: #{tpu_custom_call.1} parent=1 // pred_check_branch
      %16 = sbr.rel (0) target = $region13
    $region12: #{tpu_custom_call.1} parent=1 // pred_region
      _
    $region13: #{tpu_custom_call.1} parent=1 // pred_fallthru
      _
    // Predicated region
    $region14: #{tpu_custom_call.1} parent=1 // pred_check
      _
    $region15: #{tpu_custom_call.1} parent=1 // pred_check_branch
      %18 = sbr.rel (0) target = $region17
    $region16: #{tpu_custom_call.1} parent=1 // pred_region
      _
    $region17: #{tpu_custom_call.1} parent=1 // pred_fallthru
      _
    // Predicated region
    $region18: #{tpu_custom_call.1} parent=1 // pred_check
      _
    $region19: #{tpu_custom_call.1} parent=1 // pred_check_branch
      %20 = sbr.rel (0) target = $region21
    $region20: #{tpu_custom_call.1} parent=1 // pred_region
      _
    $region21: #{tpu_custom_call.1} parent=1 // pred_fallthru
      _
    %v22 = vld [vmem:[%s0] sm:$0xff]
    %v23 = vld [vmem:[%s1] sm:$0xff]
    %v24 = vld [vmem:[%s1 + $0x8] sm:$0xff]
    %v25 = vld [vmem:[%s2] sm:$0x3]
    %v26 = vld [vmem:[%s3] sm:$0xf]
    %v27 = vld [vmem:[%s3 + $0x4] sm:$0xf]
    %v28 = vld [vmem:[%s3 + $0x8] sm:$0xf]
    %v29 = vld [vmem:[%s3 + $0xc] sm:$0xf]
    %v30 = vld [vmem:[%s3 + $0x10] sm:$0xf]
    %v31 = vld [vmem:[%s3 + $0x14] sm:$0xf]
    %v32 = vld [vmem:[%s3 + $0x18] sm:$0xf]
    %v33 = vld [vmem:[%s3 + $0x1c] sm:$0xf]
    %v34 = vld [vmem:[%s3 + $0x20] sm:$0xf]
    %v35 = vld [vmem:[%s3 + $0x24] sm:$0xf]
    %v36 = vld [vmem:[%s3 + $0x28] sm:$0xf]
    %v37 = vld [vmem:[%s3 + $0x2c] sm:$0xf]
    %v38 = vld [vmem:[%s3 + $0x30] sm:$0xf]
    %v39 = vld [vmem:[%s3 + $0x34] sm:$0xf]
    %v40 = vld [vmem:[%s3 + $0x38] sm:$0xf]
    %v41 = vld [vmem:[%s3 + $0x3c] sm:$0xf]
    %v42 = vld [vmem:[%s3 + $0x40] sm:$0xf]
    %v43 = vld [vmem:[%s3 + $0x44] sm:$0xf]
    %v44 = vld [vmem:[%s3 + $0x48] sm:$0xf]
    %v45 = vld [vmem:[%s3 + $0x4c] sm:$0xf]
    %v46 = vld [vmem:[%s3 + $0x50] sm:$0xf]
    %v47 = vld [vmem:[%s3 + $0x54] sm:$0xf]
    %v48 = vld [vmem:[%s3 + $0x58] sm:$0xf]
    %v49 = vld [vmem:[%s3 + $0x5c] sm:$0xf]
    %v50 = vld [vmem:[%s3 + $0x60] sm:$0xf]
    %v51 = vld [vmem:[%s3 + $0x64] sm:$0xf]
    %v52 = vld [vmem:[%s3 + $0x68] sm:$0xf]
    %v53 = vld [vmem:[%s3 + $0x6c] sm:$0xf]
    %v54 = vld [vmem:[%s3 + $0x70] sm:$0xf]
    %v55 = vld [vmem:[%s3 + $0x74] sm:$0xf]
    %v56 = vld [vmem:[%s3 + $0x78] sm:$0xf]
    %v57 = vld [vmem:[%s3 + $0x7c] sm:$0xf]
    %v58 = vld [vmem:[%s4] sm:$0x1]
    %v59 = vpack.c.bf16 %v22, %v22
    %v61 = vlaneseq
    %v62 = vshrl.u32 %v61, 7
    %v63 = vsub.s32 0, %v62
    %v64 = vrot.slane %v25, %v63
    %v65 = vlaneseq
    %v66 = vshrl.u32 %v65, 7
    %v67 = vsub.s32 1, %v66
    %v68 = vrot.slane %v25, %v67
    %v73 = vunpack.c.l.b16 %v23
    %v74 = vunpack.c.h.b16 %v23
    %v75 = vunpack.c.l.b16 %v24
    %v76 = vunpack.c.h.b16 %v24
    %v77 = vpack.c.b16 %v75, %v73
    %v78 = vpack.c.b16 %v76, %v74
    %vm81 = vcmask 130048
    %v83 = vsel %vm81, %v59, 0
    %85 = vmatprep.subr.bf16.mxu0 %v78
    %86 = vmatpush1.bf16.msra.mxu0 %v77
    %87 = vmatprep.subr.bf16.mxu0 0
    %88 = vmatpush1.bf16.msra.mxu0 0
    %89 = vmatprep.subr.bf16.mxu0 0
    %90 = vmatpush1.bf16.msra.mxu0 0
    %91 = vmatprep.subr.bf16.mxu0 0
    %92 = vmatpush1.bf16.msra.mxu0 0
    %93 = vmatprep.subr.bf16.mxu0 0
    %94 = vmatpush1.bf16.msra.mxu0 0
    %95 = vmatprep.subr.bf16.mxu0 0
    %96 = vmatpush1.bf16.msra.mxu0 0
    %97 = vmatprep.subr.bf16.mxu0 0
    %98 = vmatpush1.bf16.msra.mxu0 0
    %99 = vmatprep.subr.bf16.mxu0 0
    %100 = vmatpush1.bf16.msra.mxu0 0
    %101 = vmatprep.subr.bf16.mxu0 0
    %102 = vmatpush1.bf16.msra.mxu0 0
    %103 = vmatprep.subr.bf16.mxu0 0
    %104 = vmatpush1.bf16.msra.mxu0 0
    %105 = vmatprep.subr.bf16.mxu0 0
    %106 = vmatpush1.bf16.msra.mxu0 0
    %107 = vmatprep.subr.bf16.mxu0 0
    %108 = vmatpush1.bf16.msra.mxu0 0
    %109 = vmatprep.subr.bf16.mxu0 0
    %110 = vmatpush1.bf16.msra.mxu0 0
    %111 = vmatprep.subr.bf16.mxu0 0
    %112 = vmatpush1.bf16.msra.mxu0 0
    %113 = vmatprep.subr.bf16.mxu0 0
    %114 = vmatpush1.bf16.msra.mxu0 0
    %115 = vmatprep.subr.bf16.mxu0 0
    %116 = vmatpush1.bf16.msra.mxu0 0
    %117 = vmatprep.mubr.bf16.mxu0 0
    %118 = vmatmul.mubr.bf16.gmra.mrb[0].mxu0 %v83
    %v119 = vpop.f32.mrb[0].mxu0
    %v120 = vadd.f32 %v64, %v119
    %v121 = vpop.f32.mrb[0].mxu0
    %v122 = vadd.f32 %v68, %v121
    %v123 = vpop.f32.mrb[0].mxu0
    %v124 = vpop.f32.mrb[0].mxu0
    %125 = vdwg.mxu0
    %v126 = vmax.f32 %v120, 0.0
    %v127 = vmax.f32 %v122, 0.0
    %v128 = vpack.c.bf16 %v126, %v126
    %v129 = vpack.c.bf16 %v127, %v127
    %v131 = vlaneseq
    %v132 = vshrl.u32 %v131, 7
    %v133 = vsub.s32 0, %v132
    %v134 = vrot.slane %v58, %v133
    %v168 = vunpack.c.l.b16 %v26
    %v169 = vunpack.c.l.b16 %v27
    %v170 = vunpack.c.l.b16 %v28
    %v171 = vunpack.c.l.b16 %v29
    %v172 = vunpack.c.l.b16 %v30
    %v173 = vunpack.c.l.b16 %v31
    %v174 = vunpack.c.l.b16 %v32
    %v175 = vunpack.c.l.b16 %v33
    %v176 = vunpack.c.l.b16 %v34
    %v177 = vunpack.c.l.b16 %v35
    %v178 = vunpack.c.l.b16 %v36
    %v179 = vunpack.c.l.b16 %v37
    %v180 = vunpack.c.l.b16 %v38
    %v181 = vunpack.c.l.b16 %v39
    %v182 = vunpack.c.l.b16 %v40
    %v183 = vunpack.c.l.b16 %v41
    %v184 = vunpack.c.l.b16 %v42
    %v185 = vunpack.c.l.b16 %v43
    %v186 = vunpack.c.l.b16 %v44
    %v187 = vunpack.c.l.b16 %v45
    %v188 = vunpack.c.l.b16 %v46
    %v189 = vunpack.c.l.b16 %v47
    %v190 = vunpack.c.l.b16 %v48
    %v191 = vunpack.c.l.b16 %v49
    %v192 = vunpack.c.l.b16 %v50
    %v193 = vunpack.c.l.b16 %v51
    %v194 = vunpack.c.l.b16 %v52
    %v195 = vunpack.c.l.b16 %v53
    %v196 = vunpack.c.l.b16 %v54
    %v197 = vunpack.c.l.b16 %v55
    %v198 = vunpack.c.l.b16 %v56
    %v199 = vunpack.c.l.b16 %v57
    %v200 = vpack.c.b16 %v169, %v168
    %v201 = vpack.c.b16 %v171, %v170
    %v202 = vpack.c.b16 %v173, %v172
    %v203 = vpack.c.b16 %v175, %v174
    %v204 = vpack.c.b16 %v177, %v176
    %v205 = vpack.c.b16 %v179, %v178
    %v206 = vpack.c.b16 %v181, %v180
    %v207 = vpack.c.b16 %v183, %v182
    %v208 = vpack.c.b16 %v185, %v184
    %v209 = vpack.c.b16 %v187, %v186
    %v210 = vpack.c.b16 %v189, %v188
    %v211 = vpack.c.b16 %v191, %v190
    %v212 = vpack.c.b16 %v193, %v192
    %v213 = vpack.c.b16 %v195, %v194
    %v214 = vpack.c.b16 %v197, %v196
    %v215 = vpack.c.b16 %v199, %v198
    %232 = vmatprep.subr.bf16.mxu0 0
    %233 = vmatpush1.bf16.msra.mxu0 %v200
    %234 = vmatprep.subr.bf16.mxu0 0
    %235 = vmatpush1.bf16.msra.mxu0 %v201
    %236 = vmatprep.subr.bf16.mxu0 0
    %237 = vmatpush1.bf16.msra.mxu0 %v202
    %238 = vmatprep.subr.bf16.mxu0 0
    %239 = vmatpush1.bf16.msra.mxu0 %v203
    %240 = vmatprep.subr.bf16.mxu0 0
    %241 = vmatpush1.bf16.msra.mxu0 %v204
    %242 = vmatprep.subr.bf16.mxu0 0
    %243 = vmatpush1.bf16.msra.mxu0 %v205
    %244 = vmatprep.subr.bf16.mxu0 0
    %245 = vmatpush1.bf16.msra.mxu0 %v206
    %246 = vmatprep.subr.bf16.mxu0 0
    %247 = vmatpush1.bf16.msra.mxu0 %v207
    %248 = vmatprep.subr.bf16.mxu0 0
    %249 = vmatpush1.bf16.msra.mxu0 %v208
    %250 = vmatprep.subr.bf16.mxu0 0
    %251 = vmatpush1.bf16.msra.mxu0 %v209
    %252 = vmatprep.subr.bf16.mxu0 0
    %253 = vmatpush1.bf16.msra.mxu0 %v210
    %254 = vmatprep.subr.bf16.mxu0 0
    %255 = vmatpush1.bf16.msra.mxu0 %v211
    %256 = vmatprep.subr.bf16.mxu0 0
    %257 = vmatpush1.bf16.msra.mxu0 %v212
    %258 = vmatprep.subr.bf16.mxu0 0
    %259 = vmatpush1.bf16.msra.mxu0 %v213
    %260 = vmatprep.subr.bf16.mxu0 0
    %261 = vmatpush1.bf16.msra.mxu0 %v214
    %262 = vmatprep.subr.bf16.mxu0 0
    %263 = vmatpush1.bf16.msra.mxu0 %v215
    %264 = vmatprep.mubr.bf16.mxu0 %v129
    %265 = vmatmul.mubr.bf16.gmra.mrb[0].mxu0 %v128
    %v266 = vpop.f32.mrb[0].mxu0
    %v267 = vadd.f32 %v134, %v266
    %v268 = vpop.f32.mrb[0].mxu0
    %v269 = vpop.f32.mrb[0].mxu0
    %v270 = vpop.f32.mrb[0].mxu0
    %271 = vdwg.mxu0
    %vm272 = vcmask 64512
    %v273 = vsel %vm272, %v267, -inf
    %274 = vmax.xlane.f32.xlu0 %v273
    %v275 = vpop.xlane.xlu0 %274
    %v276 = vsub.f32 %v267, %v275
    %v277 = vmul.f32 %v276, 1.442695
    %v278 = vpow.pop %v277
    %v279 = vsel %vm272, %v278, 0.0
    %280 = vadd.xlane.f32.xlu0 %v279
    %v281 = vpop.xlane.xlu0 %280
    %v282 = vrcp.pop %v281
    %v283 = vmul.f32 %v278, %v282
    %284 = vst.msk [vmem:[#allocation2] sm:$0xff] %vm272, %v283
    // Predicated region
    $region22: #{tpu_custom_call.1} parent=1 // pred_check
      _
    $region23: #{tpu_custom_call.1} parent=1 // pred_check_branch
      %286 = sbr.rel (0) target = $region25
    $region24: #{tpu_custom_call.1} parent=1 // pred_region
      %s288 = ssub.s32 128, 128
      %289 = vsyncadd [#allocation3], %s288
      %s291 = sshll.u32 [#allocation2], 4
      %s292 = int_to_ptr.vmem [resolvable:$true] %s291
      %294 = dma.vmem_to_hbm [thread:$0]  %s292, 128, %s5, [#allocation3]
    $region25: #{tpu_custom_call.1} parent=1 // pred_fallthru
      _
    // Predicated region
    $region26: #{tpu_custom_call.1} parent=1 // pred_check
      _
    $region27: #{tpu_custom_call.1} parent=1 // pred_check_branch
      %296 = sbr.rel (0) target = $region29
    $region28: #{tpu_custom_call.1} parent=1 // pred_region
      %297 = dma.done [#allocation3], 128
    $region29: #{tpu_custom_call.1} parent=1 // pred_fallthru
      _
    %298 = vsyncpa [#allocation3], 1

</llo_original>
